<compile_context>
chip_gen: v6e
topology: v6e:2x2x1
jax: 0.10.0
libtpu: 0.0.40
codegen_flags: <defaults>
</compile_context>

<pallas_src>
import functools

import jax
import jax.numpy as jnp
from jax.experimental import pallas as pl
from jax.experimental.pallas import tpu as pltpu


def _rel_score_kernel(ht_ref, w_ref, seg_ref, out_ref, *, eps):
    two, nt, d = ht_ref.shape

    # Single fused matmul: head & tail rows against ALL relations at once.
    ht = ht_ref[...].reshape(two * nt, d)                         # (2*nt, D)
    proj = jnp.dot(ht, w_ref[...],
                   preferred_element_type=jnp.float32)            # (2*nt, R*D2)
    h = proj[:nt]                                                 # (nt, R*D2)
    t = proj[nt:]                                                 # (nt, R*D2)

    # Per-relation segment sums (h·t, ||h||^2, ||t||^2) via one matmul against
    # a static block-diagonal ones matrix -> reductions run on the MXU.
    prods = jnp.concatenate([h * t, h * h, t * t], axis=0)        # (3*nt, R*D2)
    sums = jnp.dot(prods, seg_ref[...],
                   preferred_element_type=jnp.float32)            # (3*nt, R)
    dot = sums[:nt]
    nh2 = sums[nt:2 * nt]
    nt2 = sums[2 * nt:]

    # torch CosineSimilarity: dot / max(||h||*||t||, eps)
    #                       == dot * rsqrt(max(nh2*nt2, eps^2))
    eps2 = jnp.float32(eps) * jnp.float32(eps)
    cos = dot * jax.lax.rsqrt(jnp.maximum(nh2 * nt2, eps2))
    out_ref[...] = cos.astype(out_ref.dtype)


def _round_up(x, m):
    return ((x + m - 1) // m) * m


def get_rel_score(head_embedds, tail_embedds, w_stack, *, eps=1e-8,
                  max_tile=512):
    """head/tail: (N, D) f32, w_stack: (R, D, D2) f32 -> (N, R) f32."""
    n, d = head_embedds.shape
    r, d_, d2 = w_stack.shape
    assert d == d_, "W rows must match embedding dim"

    # Sublane-aligned tile over N; pad N so the grid divides evenly.
    n_tile = min(max_tile, _round_up(n, 8))
    n_pad = _round_up(n, n_tile)
    if n_pad != n:
        pad = ((0, n_pad - n), (0, 0))
        head_embedds = jnp.pad(head_embedds, pad)
        tail_embedds = jnp.pad(tail_embedds, pad)

    # Fuse head & tail into one operand so the kernel issues a single matmul.
    ht = jnp.stack([head_embedds, tail_embedds], axis=0)          # (2, Np, D)
    # Batch all relations into the lane dimension:
    #   w_wide[:, k*D2:(k+1)*D2] == w_stack[k]
    w_wide = jnp.transpose(w_stack, (1, 0, 2)).reshape(d, r * d2)
    # Block-diagonal ones segment-sum matrix (R*D2, R).
    seg = (jnp.arange(r * d2)[:, None] // d2
           == jnp.arange(r)[None, :]).astype(jnp.float32)

    grid = (n_pad // n_tile,)
    kernel = functools.partial(_rel_score_kernel, eps=eps)

    out = pl.pallas_call(
        kernel,
        out_shape=jax.ShapeDtypeStruct((n_pad, r), jnp.float32),
        grid_spec=pltpu.PrefetchScalarGridSpec(
            num_scalar_prefetch=0,
            grid=grid,
            in_specs=[
                pl.BlockSpec((2, n_tile, d), lambda i: (0, i, 0)),   # head+tail
                pl.BlockSpec((d, r * d2), lambda i: (0, 0)),         # all W_r
                pl.BlockSpec((r * d2, r), lambda i: (0, 0)),         # seg-sum
            ],
            out_specs=pl.BlockSpec((n_tile, r), lambda i: (i, 0)),
        ),
        compiler_params=pltpu.CompilerParams(
            dimension_semantics=("parallel",)),
    )(ht, w_wide, seg)
    return out[:n]


def ref_get_rel_score(head, tail, w_stack, eps=1e-8):
    h = jnp.einsum("nd,rde->rne", head, w_stack)
    t = jnp.einsum("nd,rde->rne", tail, w_stack)
    dot = jnp.sum(h * t, axis=-1)
    denom = jnp.maximum(
        jnp.linalg.norm(h, axis=-1) * jnp.linalg.norm(t, axis=-1), eps)
    return (dot / denom).T


def xavier_uniform(key, shape, gain):
    # matches torch.nn.init.xavier_uniform_ for a 2D (fan_out, fan_in) tensor
    fan_out, fan_in = shape
    bound = gain * jnp.sqrt(6.0 / (fan_in + fan_out))
    return jax.random.uniform(key, shape, jnp.float32, -bound, bound)


if __name__ == "__main__":
    # Module config (mirrors Get_rel_score.__init__)
    relation = {0: "friend_of", 1: "works_with", 2: "parent_of"}
    out_dims, out_dims2 = 32, 16     # W_r : (out_dims, out_dims2)
    rel_mean = 1.0                   # xavier gain
    N = 20                           # number of (head, tail) pairs (tests pad)

    key = jax.random.PRNGKey(0)
    k_head, k_tail, *k_w = jax.random.split(key, 2 + len(relation))

    head_embedds = jax.random.normal(k_head, (N, out_dims), jnp.float32)
    tail_embedds = jax.random.normal(k_tail, (N, out_dims), jnp.float32)
    w_stack = jnp.stack(
        [xavier_uniform(k_w[i], (out_dims, out_dims2), rel_mean)
         for i in range(len(relation))], axis=0)                 # (R, D, D2)

    out = jax.jit(get_rel_score)(head_embedds, tail_embedds, w_stack)
    out = jax.block_until_ready(out)

    ref = ref_get_rel_score(head_embedds, tail_embedds, w_stack)
    assert out.shape == (N, len(relation)), out.shape
    assert jnp.allclose(out, ref, rtol=1e-5, atol=1e-5), (out, ref)
    print("KERNEL_OK")
</pallas_src>

<mosaic_0001>
module attributes {stable_mosaic.version = 11 : i64} {
  func.func @_rel_score_kernel(%arg0: i32, %arg1: memref<2x24x32xf32, #tpu.memory_space<vmem>>, %arg2: memref<32x48xf32, #tpu.memory_space<vmem>>, %arg3: memref<48x3xf32, #tpu.memory_space<vmem>>, %arg4: memref<24x3xf32, #tpu.memory_space<vmem>>) attributes {dimension_semantics = [#tpu.dimension_semantics<parallel>], iteration_bounds = array<i64: 1>, scalar_prefetch = 0 : i64, scratch_operands = 0 : i64, tpu.core_type = #tpu.core_type<tc>, window_params = [{transform_indices = @transform_0, window_bounds = array<i64: 2, 24, 32>}, {pipeline_mode = #tpu.pipeline_mode<synchronous>, transform_indices = @transform_1, window_bounds = array<i64: 32, 48>}, {pipeline_mode = #tpu.pipeline_mode<synchronous>, transform_indices = @transform_2, window_bounds = array<i64: 48, 3>}, {transform_indices = @transform_3, window_bounds = array<i64: 24, 3>}]} {
    %c0 = arith.constant 0 : index
    %c0_0 = arith.constant 0 : index
    %c0_1 = arith.constant 0 : index
    %0 = vector.load %arg1[%c0, %c0_0, %c0_1] : memref<2x24x32xf32, #tpu.memory_space<vmem>>, vector<2x24x32xf32>
    %1 = vector.shape_cast %0 : vector<2x24x32xf32> to vector<48x32xf32>
    %c0_2 = arith.constant 0 : index
    %c0_3 = arith.constant 0 : index
    %2 = vector.load %arg2[%c0_2, %c0_3] : memref<32x48xf32, #tpu.memory_space<vmem>>, vector<32x48xf32>
    %cst = arith.constant dense<0.000000e+00> : vector<48x48xf32>
    %3 = tpu.matmul %1, %2, %cst {dimension_numbers = #tpu.dot_dimension_numbers<[1], [0], [0], [1], [0, 0, 1, 1], [], []>} : vector<48x32xf32>, vector<32x48xf32>, vector<48x48xf32> -> vector<48x48xf32>
    %4 = vector.extract_strided_slice %3 {offsets = [0, 0], sizes = [24, 48], strides = [1, 1]} : vector<48x48xf32> to vector<24x48xf32>
    %5 = vector.extract_strided_slice %3 {offsets = [24, 0], sizes = [24, 48], strides = [1, 1]} : vector<48x48xf32> to vector<24x48xf32>
    %6 = arith.mulf %4, %5 : vector<24x48xf32>
    %7 = arith.mulf %4, %4 : vector<24x48xf32>
    %8 = arith.mulf %5, %5 : vector<24x48xf32>
    %9 = tpu.concatenate %6, %7, %8 in 0 : vector<24x48xf32>, vector<24x48xf32>, vector<24x48xf32> -> vector<72x48xf32>
    %c0_4 = arith.constant 0 : index
    %c0_5 = arith.constant 0 : index
    %10 = vector.load %arg3[%c0_4, %c0_5] : memref<48x3xf32, #tpu.memory_space<vmem>>, vector<48x3xf32>
    %cst_6 = arith.constant dense<0.000000e+00> : vector<72x3xf32>
    %11 = tpu.matmul %9, %10, %cst_6 {dimension_numbers = #tpu.dot_dimension_numbers<[1], [0], [0], [1], [0, 0, 1, 1], [], []>} : vector<72x48xf32>, vector<48x3xf32>, vector<72x3xf32> -> vector<72x3xf32>
    %12 = vector.extract_strided_slice %11 {offsets = [0, 0], sizes = [24, 3], strides = [1, 1]} : vector<72x3xf32> to vector<24x3xf32>
    %13 = vector.extract_strided_slice %11 {offsets = [24, 0], sizes = [24, 3], strides = [1, 1]} : vector<72x3xf32> to vector<24x3xf32>
    %14 = vector.extract_strided_slice %11 {offsets = [48, 0], sizes = [24, 3], strides = [1, 1]} : vector<72x3xf32> to vector<24x3xf32>
    %cst_7 = arith.constant 9.99999993E-9 : f32
    %cst_8 = arith.constant 9.99999993E-9 : f32
    %15 = arith.mulf %cst_7, %cst_8 : f32
    %16 = arith.mulf %13, %14 : vector<24x3xf32>
    %17 = vector.broadcast %15 : f32 to vector<24x3xf32>
    %18 = arith.maximumf %16, %17 : vector<24x3xf32>
    %19 = math.rsqrt %18 : vector<24x3xf32>
    %20 = arith.mulf %12, %19 : vector<24x3xf32>
    %c0_9 = arith.constant 0 : index
    %c0_10 = arith.constant 0 : index
    %21 = vector.load %arg4[%c0_9, %c0_10] : memref<24x3xf32, #tpu.memory_space<vmem>>, vector<24x3xf32>
    tpu.vector_store %arg4[%c0_9, %c0_10], %20 {strides = array<i32>} : memref<24x3xf32, #tpu.memory_space<vmem>>, vector<24x3xf32>,
    return
  }
  func.func @transform_0(%arg0: i32) -> (i32, i32, i32) {
    %c0_i32 = arith.constant 0 : i32
    %c0_i32_0 = arith.constant 0 : i32
    %c0_i32_1 = arith.constant 0 : i32
    return %c0_i32, %arg0, %c0_i32_0 : i32, i32, i32
  }
  func.func @transform_1(%arg0: i32) -> (i32, i32) {
    %c0_i32 = arith.constant 0 : i32
    %c0_i32_0 = arith.constant 0 : i32
    %c0_i32_1 = arith.constant 0 : i32
    return %c0_i32, %c0_i32_0 : i32, i32
  }
  func.func @transform_2(%arg0: i32) -> (i32, i32) {
    %c0_i32 = arith.constant 0 : i32
    %c0_i32_0 = arith.constant 0 : i32
    %c0_i32_1 = arith.constant 0 : i32
    return %c0_i32, %c0_i32_0 : i32, i32
  }
  func.func @transform_3(%arg0: i32) -> (i32, i32) {
    %c0_i32 = arith.constant 0 : i32
    %c0_i32_0 = arith.constant 0 : i32
    return %arg0, %c0_i32 : i32, i32
  }
}

</mosaic_0001>

<llo_original>
// kernel: get_rel_score.1
$region0: #{get_rel_score.1}
  #allocation0 [shape = 'u32[]', space=smem, size = 0x4, offset = 0x4, fixed_abs, tag = 'smem constant byte address 0x4 - core index']
  #allocation1 [shape = 'u32[144,128]{1,0:T(1,128)}', space=vmem, size = 0x12000, scoped, tag = 'internal scratch']
  %s0 = inlined_call_operand.vmem [shape: f32[2,24,32], index: 0, kind: input, shape index: {}]
  %s1 = inlined_call_operand.vmem [shape: f32[32,48], index: 1, kind: input, shape index: {}]
  %s2 = inlined_call_operand.vmem [shape: f32[48,3], index: 2, kind: input, shape index: {}]
  %s3 = inlined_call_operand.vmem [shape: f32[24,3], index: 3, kind: output, shape index: {}]
  %s4 = sld [smem:[#allocation0]]
  $region22: #{get_rel_score.1} parent=0
    _
  %s6 = ssub.s32 1, %s4
  %s7 = scalar_select 0, %s6, %s4
  // Predicated region
  $region2: #{get_rel_score.1} parent=0 // pred_check
    _
  $region3: #{get_rel_score.1} parent=0 // pred_check_branch
    %9 = sbr.rel (0) target = $region5
  $region4: #{get_rel_score.1} parent=0 // pred_region
    _
  $region5: #{get_rel_score.1} parent=0 // pred_fallthru
    _
  // Predicated region
  $region6: #{get_rel_score.1} parent=0 // pred_check
    _
  $region7: #{get_rel_score.1} parent=0 // pred_check_branch
    %11 = sbr.rel (0) target = $region9
  $region8: #{get_rel_score.1} parent=0 // pred_region
    _
  $region9: #{get_rel_score.1} parent=0 // pred_fallthru
    _
  // Predicated region
  $region10: #{get_rel_score.1} parent=0 // pred_check
    _
  $region11: #{get_rel_score.1} parent=0 // pred_check_branch
    %13 = sbr.rel (0) target = $region13
  $region12: #{get_rel_score.1} parent=0 // pred_region
    _
  $region13: #{get_rel_score.1} parent=0 // pred_fallthru
    _
  %v14 = vld [vmem:[%s0] sm:$0xff]
  %v15 = vld [vmem:[%s0 + $0x8] sm:$0xff]
  %v16 = vld [vmem:[%s0 + $0x10] sm:$0xff]
  %v17 = vld [vmem:[%s0 + $0x18] sm:$0xff]
  %v18 = vld [vmem:[%s0 + $0x20] sm:$0xff]
  %v19 = vld [vmem:[%s0 + $0x28] sm:$0xff]
  %v20 = vld [vmem:[%s1] sm:$0xff]
  %v21 = vld [vmem:[%s1 + $0x8] sm:$0xff]
  %v22 = vld [vmem:[%s1 + $0x10] sm:$0xff]
  %v23 = vld [vmem:[%s1 + $0x18] sm:$0xff]
  %vm24 = vcmask 261120
  %v26 = vsel %vm24, %v14, 0
  %v29 = vsel %vm24, %v15, 0
  %v32 = vsel %vm24, %v16, 0
  %v35 = vsel %vm24, %v17, 0
  %v38 = vsel %vm24, %v18, 0
  %v41 = vsel %vm24, %v19, 0
  %43 = vmatprep.subr.mxu0 0.0
  %44 = vmatpush1.msra.mxu0 0.0
  %45 = vmatprep.subr.mxu0 0.0
  %46 = vmatpush1.msra.mxu0 0.0
  %47 = vmatprep.subr.mxu0 0.0
  %48 = vmatpush1.msra.mxu0 0.0
  %49 = vmatprep.subr.mxu0 0.0
  %50 = vmatpush1.msra.mxu0 0.0
  %51 = vmatprep.subr.mxu0 0.0
  %52 = vmatpush1.msra.mxu0 0.0
  %53 = vmatprep.subr.mxu0 0.0
  %54 = vmatpush1.msra.mxu0 0.0
  %55 = vmatprep.subr.mxu0 0.0
  %56 = vmatpush1.msra.mxu0 0.0
  %57 = vmatprep.subr.mxu0 0.0
  %58 = vmatpush1.msra.mxu0 0.0
  %59 = vmatprep.subr.mxu0 0.0
  %60 = vmatpush1.msra.mxu0 0.0
  %61 = vmatprep.subr.mxu0 0.0
  %62 = vmatpush1.msra.mxu0 0.0
  %63 = vmatprep.subr.mxu0 0.0
  %64 = vmatpush1.msra.mxu0 0.0
  %65 = vmatprep.subr.mxu0 0.0
  %66 = vmatpush1.msra.mxu0 0.0
  %67 = vmatprep.subr.mxu0 0.0
  %68 = vmatpush1.msra.mxu0 %v23
  %69 = vmatprep.subr.mxu0 0.0
  %70 = vmatpush1.msra.mxu0 %v22
  %71 = vmatprep.subr.mxu0 0.0
  %72 = vmatpush1.msra.mxu0 %v21
  %73 = vmatprep.subr.mxu0 0.0
  %74 = vmatpush1.msra.mxu0 %v20
  %75 = vmatprep.subr.mxu0 0.0
  %76 = vmatpush2.msra.mxu0 0.0
  %77 = vmatprep.subr.mxu0 0.0
  %78 = vmatpush2.msra.mxu0 0.0
  %79 = vmatprep.subr.mxu0 0.0
  %80 = vmatpush2.msra.mxu0 0.0
  %81 = vmatprep.subr.mxu0 0.0
  %82 = vmatpush2.msra.mxu0 0.0
  %83 = vmatprep.subr.mxu0 0.0
  %84 = vmatpush2.msra.mxu0 0.0
  %85 = vmatprep.subr.mxu0 0.0
  %86 = vmatpush2.msra.mxu0 0.0
  %87 = vmatprep.subr.mxu0 0.0
  %88 = vmatpush2.msra.mxu0 0.0
  %89 = vmatprep.subr.mxu0 0.0
  %90 = vmatpush2.msra.mxu0 0.0
  %91 = vmatprep.subr.mxu0 0.0
  %92 = vmatpush2.msra.mxu0 0.0
  %93 = vmatprep.subr.mxu0 0.0
  %94 = vmatpush2.msra.mxu0 0.0
  %95 = vmatprep.subr.mxu0 0.0
  %96 = vmatpush2.msra.mxu0 0.0
  %97 = vmatprep.subr.mxu0 0.0
  %98 = vmatpush2.msra.mxu0 0.0
  %99 = vmatprep.subr.mxu0 0.0
  %100 = vmatpush2.msra.mxu0 0.0
  %101 = vmatprep.subr.mxu0 0.0
  %102 = vmatpush2.msra.mxu0 0.0
  %103 = vmatprep.subr.mxu0 0.0
  %104 = vmatpush2.msra.mxu0 0.0
  %105 = vmatprep.subr.mxu0 0.0
  %106 = vmatpush2.msra.mxu0 0.0
  %107 = vmatprep.mubr.f32.mxu0 0.0
  %108 = vmatmul.mubr.f32.gmra.mxu0 %v26
  %v109 = vpop.f32.mrf.mxu0
  %v110 = vadd.f32 0.0, %v109
  %v111 = vpop.f32.mrf.mxu0
  %112 = vmatprep.mubr.f32.mxu0 0.0
  %113 = vmatmul.mubr.f32.gmra.mxu0 %v29
  %v114 = vpop.f32.mrf.mxu0
  %v115 = vadd.f32 0.0, %v114
  %v116 = vpop.f32.mrf.mxu0
  %117 = vmatprep.mubr.f32.mxu0 0.0
  %118 = vmatmul.mubr.f32.gmra.mxu0 %v32
  %v119 = vpop.f32.mrf.mxu0
  %v120 = vadd.f32 0.0, %v119
  %v121 = vpop.f32.mrf.mxu0
  %122 = vmatprep.mubr.f32.mxu0 0.0
  %123 = vmatmul.mubr.f32.gmra.mxu0 %v35
  %v124 = vpop.f32.mrf.mxu0
  %v125 = vadd.f32 0.0, %v124
  %v126 = vpop.f32.mrf.mxu0
  %127 = vmatprep.mubr.f32.mxu0 0.0
  %128 = vmatmul.mubr.f32.gmra.mxu0 %v38
  %v129 = vpop.f32.mrf.mxu0
  %v130 = vadd.f32 0.0, %v129
  %v131 = vpop.f32.mrf.mxu0
  %132 = vmatprep.mubr.f32.mxu0 0.0
  %133 = vmatmul.mubr.f32.gmra.mxu0 %v41
  %v134 = vpop.f32.mrf.mxu0
  %v135 = vadd.f32 0.0, %v134
  %v136 = vpop.f32.mrf.mxu0
  %137 = vdwg.mxu0
  %v138 = vmul.f32 %v110, %v125
  %v139 = vmul.f32 %v115, %v130
  %v140 = vmul.f32 %v120, %v135
  %v141 = vmul.f32 %v110, %v110
  %v142 = vmul.f32 %v115, %v115
  %v143 = vmul.f32 %v120, %v120
  %v144 = vmul.f32 %v125, %v125
  %v145 = vmul.f32 %v130, %v130
  %v146 = vmul.f32 %v135, %v135
  %v147 = vld [vmem:[%s2] sm:$0xff]
  %v148 = vld [vmem:[%s2 + $0x8] sm:$0xff]
  %v149 = vld [vmem:[%s2 + $0x10] sm:$0xff]
  %v150 = vld [vmem:[%s2 + $0x18] sm:$0xff]
  %v151 = vld [vmem:[%s2 + $0x20] sm:$0xff]
  %v152 = vld [vmem:[%s2 + $0x28] sm:$0xff]
  %vm153 = vcmask 392192
  %v155 = vsel %vm153, %v138, 0
  %v158 = vsel %vm153, %v139, 0
  %v161 = vsel %vm153, %v140, 0
  %v164 = vsel %vm153, %v141, 0
  %v167 = vsel %vm153, %v142, 0
  %v170 = vsel %vm153, %v143, 0
  %v173 = vsel %vm153, %v144, 0
  %v176 = vsel %vm153, %v145, 0
  %v179 = vsel %vm153, %v146, 0
  %181 = vmatprep.subr.mxu0 0.0
  %182 = vmatpush1.msra.mxu0 0.0
  %183 = vmatprep.subr.mxu0 0.0
  %184 = vmatpush1.msra.mxu0 0.0
  %185 = vmatprep.subr.mxu0 0.0
  %186 = vmatpush1.msra.mxu0 0.0
  %187 = vmatprep.subr.mxu0 0.0
  %188 = vmatpush1.msra.mxu0 0.0
  %189 = vmatprep.subr.mxu0 0.0
  %190 = vmatpush1.msra.mxu0 0.0
  %191 = vmatprep.subr.mxu0 0.0
  %192 = vmatpush1.msra.mxu0 0.0
  %193 = vmatprep.subr.mxu0 0.0
  %194 = vmatpush1.msra.mxu0 0.0
  %195 = vmatprep.subr.mxu0 0.0
  %196 = vmatpush1.msra.mxu0 0.0
  %197 = vmatprep.subr.mxu0 0.0
  %198 = vmatpush1.msra.mxu0 0.0
  %199 = vmatprep.subr.mxu0 0.0
  %200 = vmatpush1.msra.mxu0 0.0
  %201 = vmatprep.subr.mxu0 0.0
  %202 = vmatpush1.msra.mxu0 %v152
  %203 = vmatprep.subr.mxu0 0.0
  %204 = vmatpush1.msra.mxu0 %v151
  %205 = vmatprep.subr.mxu0 0.0
  %206 = vmatpush1.msra.mxu0 %v150
  %207 = vmatprep.subr.mxu0 0.0
  %208 = vmatpush1.msra.mxu0 %v149
  %209 = vmatprep.subr.mxu0 0.0
  %210 = vmatpush1.msra.mxu0 %v148
  %211 = vmatprep.subr.mxu0 0.0
  %212 = vmatpush1.msra.mxu0 %v147
  %213 = vmatprep.subr.mxu0 0.0
  %214 = vmatpush2.msra.mxu0 0.0
  %215 = vmatprep.subr.mxu0 0.0
  %216 = vmatpush2.msra.mxu0 0.0
  %217 = vmatprep.subr.mxu0 0.0
  %218 = vmatpush2.msra.mxu0 0.0
  %219 = vmatprep.subr.mxu0 0.0
  %220 = vmatpush2.msra.mxu0 0.0
  %221 = vmatprep.subr.mxu0 0.0
  %222 = vmatpush2.msra.mxu0 0.0
  %223 = vmatprep.subr.mxu0 0.0
  %224 = vmatpush2.msra.mxu0 0.0
  %225 = vmatprep.subr.mxu0 0.0
  %226 = vmatpush2.msra.mxu0 0.0
  %227 = vmatprep.subr.mxu0 0.0
  %228 = vmatpush2.msra.mxu0 0.0
  %229 = vmatprep.subr.mxu0 0.0
  %230 = vmatpush2.msra.mxu0 0.0
  %231 = vmatprep.subr.mxu0 0.0
  %232 = vmatpush2.msra.mxu0 0.0
  %233 = vmatprep.subr.mxu0 0.0
  %234 = vmatpush2.msra.mxu0 0.0
  %235 = vmatprep.subr.mxu0 0.0
  %236 = vmatpush2.msra.mxu0 0.0
  %237 = vmatprep.subr.mxu0 0.0
  %238 = vmatpush2.msra.mxu0 0.0
  %239 = vmatprep.subr.mxu0 0.0
  %240 = vmatpush2.msra.mxu0 0.0
  %241 = vmatprep.subr.mxu0 0.0
  %242 = vmatpush2.msra.mxu0 0.0
  %243 = vmatprep.subr.mxu0 0.0
  %244 = vmatpush2.msra.mxu0 0.0
  %245 = vmatprep.mubr.f32.mxu0 0.0
  %246 = vmatmul.mubr.f32.gmra.mxu0 %v155
  %v247 = vpop.f32.mrf.mxu0
  %v248 = vadd.f32 0.0, %v247
  %v249 = vpop.f32.mrf.mxu0
  %250 = vmatprep.mubr.f32.mxu0 0.0
  %251 = vmatmul.mubr.f32.gmra.mxu0 %v158
  %v252 = vpop.f32.mrf.mxu0
  %v253 = vadd.f32 0.0, %v252
  %v254 = vpop.f32.mrf.mxu0
  %255 = vmatprep.mubr.f32.mxu0 0.0
  %256 = vmatmul.mubr.f32.gmra.mxu0 %v161
  %v257 = vpop.f32.mrf.mxu0
  %v258 = vadd.f32 0.0, %v257
  %v259 = vpop.f32.mrf.mxu0
  %260 = vmatprep.mubr.f32.mxu0 0.0
  %261 = vmatmul.mubr.f32.gmra.mxu0 %v164
  %v262 = vpop.f32.mrf.mxu0
  %v263 = vadd.f32 0.0, %v262
  %v264 = vpop.f32.mrf.mxu0
  %265 = vmatprep.mubr.f32.mxu0 0.0
  %266 = vmatmul.mubr.f32.gmra.mxu0 %v167
  %v267 = vpop.f32.mrf.mxu0
  %v268 = vadd.f32 0.0, %v267
  %v269 = vpop.f32.mrf.mxu0
  %270 = vmatprep.mubr.f32.mxu0 0.0
  %271 = vmatmul.mubr.f32.gmra.mxu0 %v170
  %v272 = vpop.f32.mrf.mxu0
  %v273 = vadd.f32 0.0, %v272
  %v274 = vpop.f32.mrf.mxu0
  %275 = vmatprep.mubr.f32.mxu0 0.0
  %276 = vmatmul.mubr.f32.gmra.mxu0 %v173
  %v277 = vpop.f32.mrf.mxu0
  %v278 = vadd.f32 0.0, %v277
  %v279 = vpop.f32.mrf.mxu0
  %280 = vmatprep.mubr.f32.mxu0 0.0
  %281 = vmatmul.mubr.f32.gmra.mxu0 %v176
  %v282 = vpop.f32.mrf.mxu0
  %v283 = vadd.f32 0.0, %v282
  %v284 = vpop.f32.mrf.mxu0
  %285 = vmatprep.mubr.f32.mxu0 0.0
  %286 = vmatmul.mubr.f32.gmra.mxu0 %v179
  %v287 = vpop.f32.mrf.mxu0
  %v288 = vadd.f32 0.0, %v287
  %v289 = vpop.f32.mrf.mxu0
  %290 = vdwg.mxu0
  %v291 = vmul.f32 %v263, %v278
  %v292 = vmul.f32 %v268, %v283
  %v293 = vmul.f32 %v273, %v288
  %v294 = vmax.f32 %v291, 1e-16
  %v295 = vmax.f32 %v292, 1e-16
  %v296 = vmax.f32 %v293, 1e-16
  %v297 = vrsqrt.pop %v294
  %v298 = vrsqrt.pop %v295
  %v299 = vrsqrt.pop %v296
  %v300 = vmul.f32 %v248, %v297
  %v301 = vmul.f32 %v253, %v298
  %v302 = vmul.f32 %v258, %v299
  %vm303 = vcmask 23552
  %304 = vst.msk [vmem:[%s3] sm:$0xff] %vm303, %v300
  %305 = vst.msk [vmem:[%s3 + $0x8] sm:$0xff] %vm303, %v301
  %306 = vst.msk [vmem:[%s3 + $0x10] sm:$0xff] %vm303, %v302
  // Predicated region
  $region14: #{get_rel_score.1} parent=0 // pred_check
    _
  $region15: #{get_rel_score.1} parent=0 // pred_check_branch
    %308 = sbr.rel (0) target = $region17
  $region16: #{get_rel_score.1} parent=0 // pred_region
    _
  $region17: #{get_rel_score.1} parent=0 // pred_fallthru
    _
  // Predicated region
  $region18: #{get_rel_score.1} parent=0 // pred_check
    _
  $region19: #{get_rel_score.1} parent=0 // pred_check_branch
    %310 = sbr.rel (0) target = $region21
  $region20: #{get_rel_score.1} parent=0 // pred_region
    _
  $region21: #{get_rel_score.1} parent=0 // pred_fallthru
    _

</llo_original>
